<compile_context>
chip_gen: v5e
topology: v5e:2x2
jax: 0.10.0
libtpu: 0.0.40
codegen_flags: <defaults>
</compile_context>

<pallas_src>
import math

import jax
import jax.numpy as jnp
from jax import lax
from jax.experimental import pallas as pl
from jax.experimental.pallas import tpu as pltpu


# ---------------------------------------------------------------------------
# Tile pickers
# ---------------------------------------------------------------------------
def _pick_tile_mult8(n, cap):
    """Largest multiple of 8 dividing n and <= cap; n itself if n <= cap or none."""
    if n <= cap:
        return n
    t = cap - (cap % 8)
    while t >= 8:
        if n % t == 0:
            return t
        t -= 8
    return n


def _pick_tile_mult128(n, cap):
    """Largest multiple of 128 dividing n and <= cap; n itself if n <= cap or none.
    Needed when the tile lands on the lane (last) dim of a BlockSpec."""
    if n <= cap:
        return n
    t = (cap // 128) * 128
    while t >= 128:
        if n % t == 0:
            return t
        t -= 128
    return n


# ---------------------------------------------------------------------------
# Kernel 1: fused QKV projection.  Emits head-major q/v and pre-transposed K.
# grid = (B, T // rt)
# ---------------------------------------------------------------------------
def _qkv_proj_kernel(x_ref, w_ref, b_ref, q_ref, kT_ref, v_ref):
    n_heads, _, hd = q_ref.shape
    C = n_heads * hd

    x = x_ref[...].astype(jnp.bfloat16)                     # (rt, C) bf16 MXU operand
    y = jnp.dot(x, w_ref[...], preferred_element_type=jnp.float32) + b_ref[...]

    q = y[:, :C]                                            # (rt, C) f32
    kT = y[:, C:2 * C].T                                    # one (rt, C)->(C, rt) transpose per tile
    v = y[:, 2 * C:]                                        # (rt, C)

    # Static per-head layout plumbing (once per row tile, amortized over all kv steps).
    for h in range(n_heads):
        sl = slice(h * hd, (h + 1) * hd)
        q_ref[h] = q[:, sl].astype(q_ref.dtype)             # (rt, hd) bf16
        kT_ref[h] = kT[sl, :].astype(kT_ref.dtype)          # (hd, rt) bf16
        v_ref[h] = v[:, sl].astype(v_ref.dtype)             # (rt, hd) bf16


# ---------------------------------------------------------------------------
# Kernel 2: flash attention over the causal lower triangle + output projection.
# grid = (B, n_pairs); (qi, ki) delivered via scalar prefetch tables.
# ---------------------------------------------------------------------------
def _flash_attn_kernel(qi_tab, ki_tab, q_ref, kT_ref, v_ref, wo_ref, bo_ref,
                       o_ref, acc_sc, m_sc, l_sc):
    n_heads, tq, hd = q_ref.shape
    tk = kT_ref.shape[2]

    p = pl.program_id(1)
    qi = qi_tab[p]                     # q-tile index for this step (SMEM scalar)
    ki = ki_tab[p]                     # kv-tile index for this step

    @pl.when(ki == 0)
    def _init():
        m_sc[...] = jnp.full(m_sc.shape, -jnp.inf, m_sc.dtype)
        l_sc[...] = jnp.zeros(l_sc.shape, l_sc.dtype)
        acc_sc[...] = jnp.zeros(acc_sc.shape, acc_sc.dtype)

    def _attend(mask):
        def head_body(h, carry):
            qh = q_ref[h]              # (tq, hd) bf16, softmax scale pre-folded
            kh = kT_ref[h]             # (hd, tk) bf16, pre-transposed -> plain MXU dot
            vh = v_ref[h]              # (tk, hd) bf16
            s = jnp.dot(qh, kh, preferred_element_type=jnp.float32)   # (tq, tk)
            if mask is not None:
                s = jnp.where(mask, -jnp.inf, s)
            m_prev = m_sc[h]                                           # (tq, 1)
            m_new = jnp.maximum(m_prev, jnp.max(s, axis=-1, keepdims=True))
            alpha = jnp.exp(m_prev - m_new)                            # (tq, 1)
            pmat = jnp.exp(s - m_new)                                  # (tq, tk) f32
            l_sc[h] = alpha * l_sc[h] + jnp.sum(pmat, axis=-1, keepdims=True)
            m_sc[h] = m_new
            pv = jnp.dot(pmat.astype(jnp.bfloat16), vh,
                         preferred_element_type=jnp.float32)           # (tq, hd)
            acc_sc[h] = alpha * acc_sc[h] + pv
            return carry

        lax.fori_loop(0, n_heads, head_body, 0)

    # The mask is only non-trivial on tiles that straddle the diagonal.
    needs_mask = (ki + 1) * tk - 1 > qi * tq

    @pl.when(needs_mask)
    def _masked():
        row = qi * tq + lax.broadcasted_iota(jnp.int32, (tq, tk), 0)
        col = ki * tk + lax.broadcasted_iota(jnp.int32, (tq, tk), 1)
        _attend(col > row)

    @pl.when(jnp.logical_not(needs_mask))
    def _unmasked():
        _attend(None)

    # Last kv step for this q tile (pairs are built so ki runs 0..k_last).
    k_last = ((qi + 1) * tq + tk - 1) // tk - 1

    @pl.when(ki == k_last)
    def _finalize():
        # Normalize each head and fold it straight into the out-projection:
        # out = sum_h (acc_h / l_h) @ WoT[h*hd:(h+1)*hd, :] + bo.
        out = None
        for h in range(n_heads):                   # runs once per q tile
            inv_l = pl.reciprocal(l_sc[h], approx=True)        # EUP slot
            ah = (acc_sc[h] * inv_l).astype(jnp.bfloat16)      # (tq, hd)
            contrib = jnp.dot(ah, wo_ref[h * hd:(h + 1) * hd, :],
                              preferred_element_type=jnp.float32)
            out = contrib if out is None else out + contrib
        o_ref[...] = (out + bo_ref[...]).astype(o_ref.dtype)


# ---------------------------------------------------------------------------
# Wrapper
# ---------------------------------------------------------------------------
def prepare_params(params, n_heads):
    """One-time weight preprocessing: fuse Q/K/V weights into (C, 3C), transpose
    to (in, out), fold the 1/sqrt(hd) scale into the Q slice, cast matmul weights
    to bf16 (MXU operands); biases stay f32."""
    C = params["wq"].shape[0]
    hd = C // n_heads
    scale = 1.0 / math.sqrt(hd)
    f32, bf16 = jnp.float32, jnp.bfloat16
    w_qkv = jnp.concatenate(
        [params["wq"].T.astype(f32) * scale,
         params["wk"].T.astype(f32),
         params["wv"].T.astype(f32)], axis=1).astype(bf16)          # (C, 3C)
    b_qkv = jnp.concatenate(
        [params["bq"].astype(f32) * scale,
         params["bk"].astype(f32),
         params["bv"].astype(f32)]).reshape(1, 3 * C)               # (1, 3C) f32
    return {
        "w_qkv": w_qkv,
        "b_qkv": b_qkv,
        "woT": params["wo"].T.astype(bf16),                         # (C, C) bf16
        "bo": params["bo"].astype(f32).reshape(1, C),               # (1, C) f32
    }


def multi_head_attention_standard(x, prepped, n_heads):
    """x: (B, T, C).  prepped: output of prepare_params."""
    B, T, C = x.shape
    assert C % n_heads == 0
    hd = C // n_heads

    # ---- pass 1: fused QKV projection -------------------------------------
    rt = _pick_tile_mult128(T, 512)     # rt lands on the lane dim of the kT output
    assert T % rt == 0

    qv_shape = jax.ShapeDtypeStruct((B, n_heads, T, hd), jnp.bfloat16)
    kT_shape = jax.ShapeDtypeStruct((B, n_heads, hd, T), jnp.bfloat16)

    q4, kT4, v4 = pl.pallas_call(
        _qkv_proj_kernel,
        out_shape=(qv_shape, kT_shape, qv_shape),
        grid_spec=pltpu.PrefetchScalarGridSpec(
            num_scalar_prefetch=0,
            grid=(B, T // rt),
            in_specs=[
                pl.BlockSpec((None, rt, C), lambda b, t: (b, t, 0)),       # x
                pl.BlockSpec((C, 3 * C), lambda b, t: (0, 0)),             # W_qkv (bf16)
                pl.BlockSpec((1, 3 * C), lambda b, t: (0, 0)),             # b_qkv (f32)
            ],
            out_specs=[
                pl.BlockSpec((None, n_heads, rt, hd), lambda b, t: (b, 0, t, 0)),  # q
                pl.BlockSpec((None, n_heads, hd, rt), lambda b, t: (b, 0, 0, t)),  # kT
                pl.BlockSpec((None, n_heads, rt, hd), lambda b, t: (b, 0, t, 0)),  # v
            ],
        ),
        compiler_params=pltpu.CompilerParams(
            dimension_semantics=("parallel", "parallel"),
            vmem_limit_bytes=40 * 1024 * 1024),
    )(x, prepped["w_qkv"], prepped["b_qkv"])

    # ---- pass 2: flash attention (causal triangle only) + out-projection ---
    tq = _pick_tile_mult8(T, 128)
    tk = _pick_tile_mult128(T, 512)     # tk lands on the lane dim of the kT block
    assert T % tq == 0 and T % tk == 0

    # Flatten the lower causal triangle of (q_tile, kv_tile) pairs into a 1-D
    # grid; kv steps for each q tile are consecutive and start at ki = 0.
    qi_list, ki_list = [], []
    for qi in range(T // tq):
        k_needed = -(-((qi + 1) * tq) // tk)        # ceil((qi+1)*tq / tk)
        for ki in range(k_needed):
            qi_list.append(qi)
            ki_list.append(ki)
    qi_tab = jnp.asarray(qi_list, jnp.int32)
    ki_tab = jnp.asarray(ki_list, jnp.int32)
    n_pairs = len(qi_list)

    out = pl.pallas_call(
        _flash_attn_kernel,
        out_shape=jax.ShapeDtypeStruct((B, T, C), x.dtype),
        grid_spec=pltpu.PrefetchScalarGridSpec(
            num_scalar_prefetch=2,
            grid=(B, n_pairs),
            in_specs=[
                pl.BlockSpec((None, n_heads, tq, hd),
                             lambda b, p, qi_t, ki_t: (b, 0, qi_t[p], 0)),   # q
                pl.BlockSpec((None, n_heads, hd, tk),
                             lambda b, p, qi_t, ki_t: (b, 0, 0, ki_t[p])),   # kT
                pl.BlockSpec((None, n_heads, tk, hd),
                             lambda b, p, qi_t, ki_t: (b, 0, ki_t[p], 0)),   # v
                pl.BlockSpec((C, C), lambda b, p, qi_t, ki_t: (0, 0)),       # woT (bf16)
                pl.BlockSpec((1, C), lambda b, p, qi_t, ki_t: (0, 0)),       # bo  (f32)
            ],
            out_specs=pl.BlockSpec((None, tq, C),
                                   lambda b, p, qi_t, ki_t: (b, qi_t[p], 0)),
            scratch_shapes=[
                pltpu.VMEM((n_heads, tq, hd), jnp.float32),  # un-normalized o accum
                pltpu.VMEM((n_heads, tq, 1), jnp.float32),   # running max m
                pltpu.VMEM((n_heads, tq, 1), jnp.float32),   # running denom l
            ],
        ),
        compiler_params=pltpu.CompilerParams(
            dimension_semantics=("parallel", "arbitrary"),
            vmem_limit_bytes=40 * 1024 * 1024),
    )(qi_tab, ki_tab, q4, kT4, v4, prepped["woT"], prepped["bo"])
    return out


# ---------------------------------------------------------------------------
# Pure-JAX f32 reference matching the PyTorch forward (eval mode).
# ---------------------------------------------------------------------------
def _reference(x, params, n_heads):
    B, T, C = x.shape
    hd = C // n_heads
    q = x @ params["wq"].T + params["bq"]
    k = x @ params["wk"].T + params["bk"]
    v = x @ params["wv"].T + params["bv"]
    q = q.reshape(B, T, n_heads, hd).transpose(0, 2, 1, 3)
    k = k.reshape(B, T, n_heads, hd).transpose(0, 2, 1, 3)
    v = v.reshape(B, T, n_heads, hd).transpose(0, 2, 1, 3)
    scores = jnp.einsum("bhqd,bhkd->bhqk", q, k) / math.sqrt(hd)
    mask = jnp.tril(jnp.ones((T, T), dtype=bool))
    scores = jnp.where(mask[None, None], scores, -jnp.inf)
    attn = jax.nn.softmax(scores, axis=-1)
    out = jnp.einsum("bhqk,bhkd->bhqd", attn, v)
    out = out.transpose(0, 2, 1, 3).reshape(B, T, C)
    return out @ params["wo"].T + params["bo"]


if __name__ == "__main__":
    # Small shapes consistent with the module.
    B, T = 2, 8
    n_embed, n_heads, block_size = 32, 4, 8

    key = jax.random.PRNGKey(0)
    keys = jax.random.split(key, 9)
    bound = 1.0 / math.sqrt(n_embed)

    def u(k, shape):
        return jax.random.uniform(k, shape, jnp.float32, -bound, bound)

    params = {
        "wq": u(keys[0], (n_embed, n_embed)), "bq": u(keys[1], (n_embed,)),
        "wk": u(keys[2], (n_embed, n_embed)), "bk": u(keys[3], (n_embed,)),
        "wv": u(keys[4], (n_embed, n_embed)), "bv": u(keys[5], (n_embed,)),
        "wo": u(keys[6], (n_embed, n_embed)), "bo": u(keys[7], (n_embed,)),
    }
    x = jax.random.normal(keys[8], (B, T, n_embed), jnp.float32)

    prepped = prepare_params(params, n_heads)
    out = multi_head_attention_standard(x, prepped, n_heads)
    out = jax.block_until_ready(out)

    ref = _reference(x, params, n_heads)
    assert out.shape == (B, T, n_embed)
    # bf16 MXU operands -> allow ~1e-2 level deviation from the f32 reference.
    max_err = float(jnp.max(jnp.abs(out - ref)))
    assert max_err < 3e-2, f"mismatch vs reference (max abs err {max_err})"

    print("KERNEL_OK")
</pallas_src>

<mosaic_0001>
module attributes {stable_mosaic.version = 11 : i64} {
  func.func @_qkv_proj_kernel(%arg0: i32, %arg1: i32, %arg2: memref<1x8x32xf32, #tpu.memory_space<vmem>>, %arg3: memref<32x96xbf16, #tpu.memory_space<vmem>>, %arg4: memref<1x96xf32, #tpu.memory_space<vmem>>, %arg5: memref<1x4x8x8xbf16, #tpu.memory_space<vmem>>, %arg6: memref<1x4x8x8xbf16, #tpu.memory_space<vmem>>, %arg7: memref<1x4x8x8xbf16, #tpu.memory_space<vmem>>) attributes {dimension_semantics = [#tpu.dimension_semantics<parallel>, #tpu.dimension_semantics<parallel>], iteration_bounds = array<i64: 2, 1>, scalar_prefetch = 0 : i64, scratch_operands = 0 : i64, tpu.core_type = #tpu.core_type<tc>, window_params = [{transform_indices = @transform_0, window_bounds = array<i64: 1, 8, 32>}, {pipeline_mode = #tpu.pipeline_mode<synchronous>, transform_indices = @transform_1, window_bounds = array<i64: 32, 96>}, {pipeline_mode = #tpu.pipeline_mode<synchronous>, transform_indices = @transform_2, window_bounds = array<i64: 1, 96>}, {transform_indices = @transform_3, window_bounds = array<i64: 1, 4, 8, 8>}, {transform_indices = @transform_4, window_bounds = array<i64: 1, 4, 8, 8>}, {transform_indices = @transform_5, window_bounds = array<i64: 1, 4, 8, 8>}]} {
    %c0 = arith.constant 0 : index
    %c0_0 = arith.constant 0 : index
    %c0_1 = arith.constant 0 : index
    %0 = vector.load %arg2[%c0, %c0_0, %c0_1] : memref<1x8x32xf32, #tpu.memory_space<vmem>>, vector<1x8x32xf32>
    %1 = vector.shape_cast %0 : vector<1x8x32xf32> to vector<8x32xf32>
    %2 = arith.truncf %1 : vector<8x32xf32> to vector<8x32xbf16>
    %c0_2 = arith.constant 0 : index
    %c0_3 = arith.constant 0 : index
    %3 = vector.load %arg3[%c0_2, %c0_3] : memref<32x96xbf16, #tpu.memory_space<vmem>>, vector<32x96xbf16>
    %cst = arith.constant dense<0.000000e+00> : vector<8x96xf32>
    %4 = tpu.matmul %2, %3, %cst {dimension_numbers = #tpu.dot_dimension_numbers<[1], [0], [0], [1], [0, 0, 1, 1], [], []>} : vector<8x32xbf16>, vector<32x96xbf16>, vector<8x96xf32> -> vector<8x96xf32>
    %c0_4 = arith.constant 0 : index
    %c0_5 = arith.constant 0 : index
    %5 = vector.load %arg4[%c0_4, %c0_5] : memref<1x96xf32, #tpu.memory_space<vmem>>, vector<1x96xf32>
    %6 = vector.broadcast %5 : vector<1x96xf32> to vector<8x96xf32>
    %7 = arith.addf %4, %6 : vector<8x96xf32>
    %8 = vector.extract_strided_slice %7 {offsets = [0, 0], sizes = [8, 32], strides = [1, 1]} : vector<8x96xf32> to vector<8x32xf32>
    %9 = vector.extract_strided_slice %7 {offsets = [0, 32], sizes = [8, 32], strides = [1, 1]} : vector<8x96xf32> to vector<8x32xf32>
    %10 = tpu.transpose %9, [1, 0] : vector<8x32xf32> -> vector<32x8xf32>
    %11 = vector.extract_strided_slice %7 {offsets = [0, 64], sizes = [8, 32], strides = [1, 1]} : vector<8x96xf32> to vector<8x32xf32>
    %12 = vector.extract_strided_slice %8 {offsets = [0, 0], sizes = [8, 8], strides = [1, 1]} : vector<8x32xf32> to vector<8x8xf32>
    %13 = arith.truncf %12 : vector<8x8xf32> to vector<8x8xbf16>
    %c0_6 = arith.constant 0 : index
    %c0_7 = arith.constant 0 : index
    %c0_8 = arith.constant 0 : index
    %c0_9 = arith.constant 0 : index
    %14 = vector.load %arg5[%c0_6, %c0_7, %c0_8, %c0_9] : memref<1x4x8x8xbf16, #tpu.memory_space<vmem>>, vector<1x1x8x8xbf16>
    %15 = vector.shape_cast %14 : vector<1x1x8x8xbf16> to vector<8x8xbf16>
    %16 = vector.shape_cast %13 : vector<8x8xbf16> to vector<1x1x8x8xbf16>
    tpu.vector_store %arg5[%c0_6, %c0_7, %c0_8, %c0_9], %16 {strides = array<i32>} : memref<1x4x8x8xbf16, #tpu.memory_space<vmem>>, vector<1x1x8x8xbf16>,
    %17 = vector.extract_strided_slice %10 {offsets = [0, 0], sizes = [8, 8], strides = [1, 1]} : vector<32x8xf32> to vector<8x8xf32>
    %18 = arith.truncf %17 : vector<8x8xf32> to vector<8x8xbf16>
    %c0_10 = arith.constant 0 : index
    %c0_11 = arith.constant 0 : index
    %c0_12 = arith.constant 0 : index
    %c0_13 = arith.constant 0 : index
    %19 = vector.load %arg6[%c0_10, %c0_11, %c0_12, %c0_13] : memref<1x4x8x8xbf16, #tpu.memory_space<vmem>>, vector<1x1x8x8xbf16>
    %20 = vector.shape_cast %19 : vector<1x1x8x8xbf16> to vector<8x8xbf16>
    %21 = vector.shape_cast %18 : vector<8x8xbf16> to vector<1x1x8x8xbf16>
    tpu.vector_store %arg6[%c0_10, %c0_11, %c0_12, %c0_13], %21 {strides = array<i32>} : memref<1x4x8x8xbf16, #tpu.memory_space<vmem>>, vector<1x1x8x8xbf16>,
    %22 = vector.extract_strided_slice %11 {offsets = [0, 0], sizes = [8, 8], strides = [1, 1]} : vector<8x32xf32> to vector<8x8xf32>
    %23 = arith.truncf %22 : vector<8x8xf32> to vector<8x8xbf16>
    %c0_14 = arith.constant 0 : index
    %c0_15 = arith.constant 0 : index
    %c0_16 = arith.constant 0 : index
    %c0_17 = arith.constant 0 : index
    %24 = vector.load %arg7[%c0_14, %c0_15, %c0_16, %c0_17] : memref<1x4x8x8xbf16, #tpu.memory_space<vmem>>, vector<1x1x8x8xbf16>
    %25 = vector.shape_cast %24 : vector<1x1x8x8xbf16> to vector<8x8xbf16>
    %26 = vector.shape_cast %23 : vector<8x8xbf16> to vector<1x1x8x8xbf16>
    tpu.vector_store %arg7[%c0_14, %c0_15, %c0_16, %c0_17], %26 {strides = array<i32>} : memref<1x4x8x8xbf16, #tpu.memory_space<vmem>>, vector<1x1x8x8xbf16>,
    %27 = vector.extract_strided_slice %8 {offsets = [0, 8], sizes = [8, 8], strides = [1, 1]} : vector<8x32xf32> to vector<8x8xf32>
    %28 = arith.truncf %27 : vector<8x8xf32> to vector<8x8xbf16>
    %c0_18 = arith.constant 0 : index
    %c1 = arith.constant 1 : index
    %c0_19 = arith.constant 0 : index
    %c0_20 = arith.constant 0 : index
    %29 = vector.load %arg5[%c0_18, %c1, %c0_19, %c0_20] : memref<1x4x8x8xbf16, #tpu.memory_space<vmem>>, vector<1x1x8x8xbf16>
    %30 = vector.shape_cast %29 : vector<1x1x8x8xbf16> to vector<8x8xbf16>
    %31 = vector.shape_cast %28 : vector<8x8xbf16> to vector<1x1x8x8xbf16>
    tpu.vector_store %arg5[%c0_18, %c1, %c0_19, %c0_20], %31 {strides = array<i32>} : memref<1x4x8x8xbf16, #tpu.memory_space<vmem>>, vector<1x1x8x8xbf16>,
    %32 = vector.extract_strided_slice %10 {offsets = [8, 0], sizes = [8, 8], strides = [1, 1]} : vector<32x8xf32> to vector<8x8xf32>
    %33 = arith.truncf %32 : vector<8x8xf32> to vector<8x8xbf16>
    %c0_21 = arith.constant 0 : index
    %c1_22 = arith.constant 1 : index
    %c0_23 = arith.constant 0 : index
    %c0_24 = arith.constant 0 : index
    %34 = vector.load %arg6[%c0_21, %c1_22, %c0_23, %c0_24] : memref<1x4x8x8xbf16, #tpu.memory_space<vmem>>, vector<1x1x8x8xbf16>
    %35 = vector.shape_cast %34 : vector<1x1x8x8xbf16> to vector<8x8xbf16>
    %36 = vector.shape_cast %33 : vector<8x8xbf16> to vector<1x1x8x8xbf16>
    tpu.vector_store %arg6[%c0_21, %c1_22, %c0_23, %c0_24], %36 {strides = array<i32>} : memref<1x4x8x8xbf16, #tpu.memory_space<vmem>>, vector<1x1x8x8xbf16>,
    %37 = vector.extract_strided_slice %11 {offsets = [0, 8], sizes = [8, 8], strides = [1, 1]} : vector<8x32xf32> to vector<8x8xf32>
    %38 = arith.truncf %37 : vector<8x8xf32> to vector<8x8xbf16>
    %c0_25 = arith.constant 0 : index
    %c1_26 = arith.constant 1 : index
    %c0_27 = arith.constant 0 : index
    %c0_28 = arith.constant 0 : index
    %39 = vector.load %arg7[%c0_25, %c1_26, %c0_27, %c0_28] : memref<1x4x8x8xbf16, #tpu.memory_space<vmem>>, vector<1x1x8x8xbf16>
    %40 = vector.shape_cast %39 : vector<1x1x8x8xbf16> to vector<8x8xbf16>
    %41 = vector.shape_cast %38 : vector<8x8xbf16> to vector<1x1x8x8xbf16>
    tpu.vector_store %arg7[%c0_25, %c1_26, %c0_27, %c0_28], %41 {strides = array<i32>} : memref<1x4x8x8xbf16, #tpu.memory_space<vmem>>, vector<1x1x8x8xbf16>,
    %42 = vector.extract_strided_slice %8 {offsets = [0, 16], sizes = [8, 8], strides = [1, 1]} : vector<8x32xf32> to vector<8x8xf32>
    %43 = arith.truncf %42 : vector<8x8xf32> to vector<8x8xbf16>
    %c0_29 = arith.constant 0 : index
    %c2 = arith.constant 2 : index
    %c0_30 = arith.constant 0 : index
    %c0_31 = arith.constant 0 : index
    %44 = vector.load %arg5[%c0_29, %c2, %c0_30, %c0_31] : memref<1x4x8x8xbf16, #tpu.memory_space<vmem>>, vector<1x1x8x8xbf16>
    %45 = vector.shape_cast %44 : vector<1x1x8x8xbf16> to vector<8x8xbf16>
    %46 = vector.shape_cast %43 : vector<8x8xbf16> to vector<1x1x8x8xbf16>
    tpu.vector_store %arg5[%c0_29, %c2, %c0_30, %c0_31], %46 {strides = array<i32>} : memref<1x4x8x8xbf16, #tpu.memory_space<vmem>>, vector<1x1x8x8xbf16>,
    %47 = vector.extract_strided_slice %10 {offsets = [16, 0], sizes = [8, 8], strides = [1, 1]} : vector<32x8xf32> to vector<8x8xf32>
    %48 = arith.truncf %47 : vector<8x8xf32> to vector<8x8xbf16>
    %c0_32 = arith.constant 0 : index
    %c2_33 = arith.constant 2 : index
    %c0_34 = arith.constant 0 : index
    %c0_35 = arith.constant 0 : index
    %49 = vector.load %arg6[%c0_32, %c2_33, %c0_34, %c0_35] : memref<1x4x8x8xbf16, #tpu.memory_space<vmem>>, vector<1x1x8x8xbf16>
    %50 = vector.shape_cast %49 : vector<1x1x8x8xbf16> to vector<8x8xbf16>
    %51 = vector.shape_cast %48 : vector<8x8xbf16> to vector<1x1x8x8xbf16>
    tpu.vector_store %arg6[%c0_32, %c2_33, %c0_34, %c0_35], %51 {strides = array<i32>} : memref<1x4x8x8xbf16, #tpu.memory_space<vmem>>, vector<1x1x8x8xbf16>,
    %52 = vector.extract_strided_slice %11 {offsets = [0, 16], sizes = [8, 8], strides = [1, 1]} : vector<8x32xf32> to vector<8x8xf32>
    %53 = arith.truncf %52 : vector<8x8xf32> to vector<8x8xbf16>
    %c0_36 = arith.constant 0 : index
    %c2_37 = arith.constant 2 : index
    %c0_38 = arith.constant 0 : index
    %c0_39 = arith.constant 0 : index
    %54 = vector.load %arg7[%c0_36, %c2_37, %c0_38, %c0_39] : memref<1x4x8x8xbf16, #tpu.memory_space<vmem>>, vector<1x1x8x8xbf16>
    %55 = vector.shape_cast %54 : vector<1x1x8x8xbf16> to vector<8x8xbf16>
    %56 = vector.shape_cast %53 : vector<8x8xbf16> to vector<1x1x8x8xbf16>
    tpu.vector_store %arg7[%c0_36, %c2_37, %c0_38, %c0_39], %56 {strides = array<i32>} : memref<1x4x8x8xbf16, #tpu.memory_space<vmem>>, vector<1x1x8x8xbf16>,
    %57 = vector.extract_strided_slice %8 {offsets = [0, 24], sizes = [8, 8], strides = [1, 1]} : vector<8x32xf32> to vector<8x8xf32>
    %58 = arith.truncf %57 : vector<8x8xf32> to vector<8x8xbf16>
    %c0_40 = arith.constant 0 : index
    %c3 = arith.constant 3 : index
    %c0_41 = arith.constant 0 : index
    %c0_42 = arith.constant 0 : index
    %59 = vector.load %arg5[%c0_40, %c3, %c0_41, %c0_42] : memref<1x4x8x8xbf16, #tpu.memory_space<vmem>>, vector<1x1x8x8xbf16>
    %60 = vector.shape_cast %59 : vector<1x1x8x8xbf16> to vector<8x8xbf16>
    %61 = vector.shape_cast %58 : vector<8x8xbf16> to vector<1x1x8x8xbf16>
    tpu.vector_store %arg5[%c0_40, %c3, %c0_41, %c0_42], %61 {strides = array<i32>} : memref<1x4x8x8xbf16, #tpu.memory_space<vmem>>, vector<1x1x8x8xbf16>,
    %62 = vector.extract_strided_slice %10 {offsets = [24, 0], sizes = [8, 8], strides = [1, 1]} : vector<32x8xf32> to vector<8x8xf32>
    %63 = arith.truncf %62 : vector<8x8xf32> to vector<8x8xbf16>
    %c0_43 = arith.constant 0 : index
    %c3_44 = arith.constant 3 : index
    %c0_45 = arith.constant 0 : index
    %c0_46 = arith.constant 0 : index
    %64 = vector.load %arg6[%c0_43, %c3_44, %c0_45, %c0_46] : memref<1x4x8x8xbf16, #tpu.memory_space<vmem>>, vector<1x1x8x8xbf16>
    %65 = vector.shape_cast %64 : vector<1x1x8x8xbf16> to vector<8x8xbf16>
    %66 = vector.shape_cast %63 : vector<8x8xbf16> to vector<1x1x8x8xbf16>
    tpu.vector_store %arg6[%c0_43, %c3_44, %c0_45, %c0_46], %66 {strides = array<i32>} : memref<1x4x8x8xbf16, #tpu.memory_space<vmem>>, vector<1x1x8x8xbf16>,
    %67 = vector.extract_strided_slice %11 {offsets = [0, 24], sizes = [8, 8], strides = [1, 1]} : vector<8x32xf32> to vector<8x8xf32>
    %68 = arith.truncf %67 : vector<8x8xf32> to vector<8x8xbf16>
    %c0_47 = arith.constant 0 : index
    %c3_48 = arith.constant 3 : index
    %c0_49 = arith.constant 0 : index
    %c0_50 = arith.constant 0 : index
    %69 = vector.load %arg7[%c0_47, %c3_48, %c0_49, %c0_50] : memref<1x4x8x8xbf16, #tpu.memory_space<vmem>>, vector<1x1x8x8xbf16>
    %70 = vector.shape_cast %69 : vector<1x1x8x8xbf16> to vector<8x8xbf16>
    %71 = vector.shape_cast %68 : vector<8x8xbf16> to vector<1x1x8x8xbf16>
    tpu.vector_store %arg7[%c0_47, %c3_48, %c0_49, %c0_50], %71 {strides = array<i32>} : memref<1x4x8x8xbf16, #tpu.memory_space<vmem>>, vector<1x1x8x8xbf16>,
    return
  }
  func.func @transform_0(%arg0: i32, %arg1: i32) -> (i32, i32, i32) {
    %c0_i32 = arith.constant 0 : i32
    %c0_i32_0 = arith.constant 0 : i32
    return %arg0, %arg1, %c0_i32 : i32, i32, i32
  }
  func.func @transform_1(%arg0: i32, %arg1: i32) -> (i32, i32) {
    %c0_i32 = arith.constant 0 : i32
    %c0_i32_0 = arith.constant 0 : i32
    %c0_i32_1 = arith.constant 0 : i32
    return %c0_i32, %c0_i32_0 : i32, i32
  }
  func.func @transform_2(%arg0: i32, %arg1: i32) -> (i32, i32) {
    %c0_i32 = arith.constant 0 : i32
    %c0_i32_0 = arith.constant 0 : i32
    %c0_i32_1 = arith.constant 0 : i32
    return %c0_i32, %c0_i32_0 : i32, i32
  }
  func.func @transform_3(%arg0: i32, %arg1: i32) -> (i32, i32, i32, i32) {
    %c0_i32 = arith.constant 0 : i32
    %c0_i32_0 = arith.constant 0 : i32
    %c0_i32_1 = arith.constant 0 : i32
    return %arg0, %c0_i32, %arg1, %c0_i32_0 : i32, i32, i32, i32
  }
  func.func @transform_4(%arg0: i32, %arg1: i32) -> (i32, i32, i32, i32) {
    %c0_i32 = arith.constant 0 : i32
    %c0_i32_0 = arith.constant 0 : i32
    %c0_i32_1 = arith.constant 0 : i32
    return %arg0, %c0_i32, %c0_i32_0, %arg1 : i32, i32, i32, i32
  }
  func.func @transform_5(%arg0: i32, %arg1: i32) -> (i32, i32, i32, i32) {
    %c0_i32 = arith.constant 0 : i32
    %c0_i32_0 = arith.constant 0 : i32
    %c0_i32_1 = arith.constant 0 : i32
    return %arg0, %c0_i32, %arg1, %c0_i32_0 : i32, i32, i32, i32
  }
}

</mosaic_0001>

<llo_original>
// kernel: tpu_custom_call.1
$region0: #{tpu_custom_call.1}
  #allocation0 [shape = 'u32[]', space=smem, size = 0x4, offset = 0x4, fixed_abs, tag = 'smem constant byte address 0x4 - core index']
  #allocation1 [shape = 'u32[72,128]{1,0:T(1,128)}', space=vmem, size = 0x9000, scoped, tag = 'internal scratch']
  %s0 = inlined_call_operand.hbm [shape: f32[2,8,32], index: 0, kind: input, shape index: {}]
  %s1 = inlined_call_operand.hbm [shape: bf16[32,96], index: 1, kind: input, shape index: {}]
  %s2 = inlined_call_operand.vmem [shape: f32[1,96], index: 2, kind: input, shape index: {}]
  %s3 = inlined_call_operand.hbm [shape: bf16[2,4,8,8], index: 3, kind: output, shape index: {0}]
  %s4 = inlined_call_operand.hbm [shape: bf16[2,4,8,8], index: 4, kind: output, shape index: {1}]
  %s5 = inlined_call_operand.hbm [shape: bf16[2,4,8,8], index: 5, kind: output, shape index: {2}]
  %6 = xla_tuple %s3, %s4, %s5
  %s7 = sld [smem:[#allocation0]]
  $region69: #{tpu_custom_call.1} parent=0
    _
  %s9 = ssub.s32 1, %s7
  %s10 = scalar_select 0, %s9, %s7
  $region1: #{tpu_custom_call.1} parent=0
    #allocation2 [shape = 'u8[8192]{0}', space=vmem, size = 0x2000, scoped, tag = 'input window, operand 0']
    #allocation3 [shape = 's32[2]{0}', space=sflag, size = 0x8, scoped, tag = 'scoped memory for tpu_custom_call.1']
    #allocation4 [shape = 's32[2]{0}', space=sflag, size = 0x8, scoped, tag = 'scoped memory for tpu_custom_call.1']
    #allocation5 [shape = 'u8[8192]{0}', space=vmem, size = 0x2000, scoped, tag = 'input window, operand 1, single buffered']
    #allocation6 [shape = 's32[1]{0}', space=sflag, size = 0x4, scoped, tag = 'scoped memory for tpu_custom_call.1']
    #allocation7 [shape = 'u8[16384]{0}', space=vmem, size = 0x4000, scoped, tag = 'output window, operand 0']
    #allocation8 [shape = 'u8[16384]{0}', space=vmem, size = 0x4000, scoped, tag = 'output window, operand 1']
    #allocation9 [shape = 's32[2]{0}', space=sflag, size = 0x8, scoped, tag = 'scoped memory for tpu_custom_call.1']
    #allocation10 [shape = 'u8[16384]{0}', space=vmem, size = 0x4000, scoped, tag = 'output window, operand 2']
    %11 = vsyncpa [#allocation3], 0
    %s12 = scalar_lea.sflag [#allocation3], 1
    %13 = vsyncpa %s12, 0
    %14 = vsyncpa [#allocation6], 0
    %15 = vsyncpa [#allocation4], 0
    %s16 = scalar_lea.sflag [#allocation4], 1
    %17 = vsyncpa %s16, 0
    %18 = vsyncpa [#allocation9], 0
    %s19 = scalar_lea.sflag [#allocation9], 1
    %20 = vsyncpa %s19, 0
    loop: start=0, step=1, limit=4
    $region2: #{tpu_custom_call.1} parent=1 // loop_pre_header
      _
    $region3: #{tpu_custom_call.1} parent=1 // loop_header
      %s22 = sphi 0, %s26
      %p23 = scmp.ge.s32.totalorder %s22, 4
      %s29 = sphi 0, %s41
      %s30 = sphi 0, %s37
      %s31 = sphi 0, %s29
      %s32 = sphi 0, %s30
      %s33 = sphi 0, %s31
      %s34 = sphi 0, %s32
      %s46 = sphi 0, %s48
      %s49 = sphi 0, %s46
      %s50 = sphi 0, %s49
      %s66 = sphi 0, %s50
      %s70 = sphi 0, %s70
      %s72 = sphi 0, %s70
      %s73 = sphi 0, %s72
      %s87 = sphi 0, %s73
      %s91 = sphi 0, %s91
      %s93 = sphi 0, %s91
      %s94 = sphi 0, %s93
      %s108 = sphi 0, %s94
      %s116 = sphi 0, %s118
      %s119 = sphi 0, %s116
      %s120 = sphi 0, %s119
      %s136 = sphi 0, %s120
      %s144 = sphi 0, %s146
      %s147 = sphi 0, %s144
      %s148 = sphi 0, %s147
      %s164 = sphi 0, %s148
      %s172 = sphi 0, %s174
      %s175 = sphi 0, %s172
      %s176 = sphi 0, %s175
      %s192 = sphi 0, %s176
    $region4: #{tpu_custom_call.1} parent=1 // loop_header_branch
      %25 = sbr.rel (%p23) target = $region8
    $region5: #{tpu_custom_call.1} parent=1 // loop_body
      %s27 = ssub.s32 %s22, 1
      %s28 = ssub.s32 %s22, 2
      %s35 = sadd.s32 1, %s30
      %p36 = scmp.ge.s32.totalorder %s35, 1
      %s37 = scalar_select %p36, 0, %s35
      %s38 = sadd.s32 1, %s29
      %s39 = scalar_select %p36, %s38, %s29
      %p40 = scmp.ge.s32.totalorder %s39, 2
      %s41 = scalar_select %p40, 0, %s39
      %s42 = ssub.s32 %s29, %s41
      %s43 = ssub.s32 %s30, %s37
      %s44 = sor.u32 %s42, %s43
      %p45 = scmp.eq.s32.totalorder %s44, 0
      %s47 = sadd.s32 %s46, 1
      %s48 = scalar_select %p45, %s46, %s47
      %p51 = pneg %p45
      %p52 = scmp.eq.s32.totalorder %s22, 1
      %p53 = por %p51, %p52
      %p54 = scmp.ne.s32.totalorder %s46, %s49
      %p55 = scmp.eq.s32.totalorder %s22, 0
      %p56 = por %p54, %p55
      %p57 = scmp.ne.s32.totalorder %s46, %s49
      %p58 = scmp.eq.s32.totalorder %s27, 1
      %p59 = por %p57, %p58
      %p60 = scmp.ne.s32.totalorder %s49, %s50
      %p61 = scmp.eq.s32.totalorder %s27, 0
      %p62 = por %p60, %p61
      %p63 = scmp.ne.s32.totalorder %s49, %s50
      %p64 = scmp.eq.s32.totalorder %s28, 1
      %p65 = por %p63, %p64
      %p67 = scmp.ne.s32.totalorder %s50, %s66
      %p68 = scmp.eq.s32.totalorder %s28, 0
      %p69 = por %p67, %p68
      %s71 = sadd.s32 %s70, 1
      %p74 = scmp.eq.s32.totalorder %s22, 1
      %p75 = scmp.ne.s32.totalorder %s70, %s72
      %p76 = scmp.eq.s32.totalorder %s22, 0
      %p77 = por %p75, %p76
      %p78 = scmp.ne.s32.totalorder %s70, %s72
      %p79 = scmp.eq.s32.totalorder %s27, 1
      %p80 = por %p78, %p79
      %p81 = scmp.ne.s32.totalorder %s72, %s73
      %p82 = scmp.eq.s32.totalorder %s27, 0
      %p83 = por %p81, %p82
      %p84 = scmp.ne.s32.totalorder %s72, %s73
      %p85 = scmp.eq.s32.totalorder %s28, 1
      %p86 = por %p84, %p85
      %p88 = scmp.ne.s32.totalorder %s73, %s87
      %p89 = scmp.eq.s32.totalorder %s28, 0
      %p90 = por %p88, %p89
      %s92 = sadd.s32 %s91, 1
      %p95 = scmp.eq.s32.totalorder %s22, 1
      %p96 = scmp.ne.s32.totalorder %s91, %s93
      %p97 = scmp.eq.s32.totalorder %s22, 0
      %p98 = por %p96, %p97
      %p99 = scmp.ne.s32.totalorder %s91, %s93
      %p100 = scmp.eq.s32.totalorder %s27, 1
      %p101 = por %p99, %p100
      %p102 = scmp.ne.s32.totalorder %s93, %s94
      %p103 = scmp.eq.s32.totalorder %s27, 0
      %p104 = por %p102, %p103
      %p105 = scmp.ne.s32.totalorder %s93, %s94
      %p106 = scmp.eq.s32.totalorder %s28, 1
      %p107 = por %p105, %p106
      %p109 = scmp.ne.s32.totalorder %s94, %s108
      %p110 = scmp.eq.s32.totalorder %s28, 0
      %p111 = por %p109, %p110
      %s112 = ssub.s32 %s29, %s41
      %s113 = ssub.s32 %s30, %s37
      %s114 = sor.u32 %s112, %s113
      %p115 = scmp.eq.s32.totalorder %s114, 0
      %s117 = sadd.s32 %s116, 1
      %s118 = scalar_select %p115, %s116, %s117
      %p121 = pneg %p115
      %p122 = scmp.eq.s32.totalorder %s22, 1
      %p123 = por %p121, %p122
      %p124 = scmp.ne.s32.totalorder %s116, %s119
      %p125 = scmp.eq.s32.totalorder %s22, 0
      %p126 = por %p124, %p125
      %p127 = scmp.ne.s32.totalorder %s116, %s119
      %p128 = scmp.eq.s32.totalorder %s27, 1
      %p129 = por %p127, %p128
      %p130 = scmp.ne.s32.totalorder %s119, %s120
      %p131 = scmp.eq.s32.totalorder %s27, 0
      %p132 = por %p130, %p131
      %p133 = scmp.ne.s32.totalorder %s119, %s120
      %p134 = scmp.eq.s32.totalorder %s28, 1
      %p135 = por %p133, %p134
      %p137 = scmp.ne.s32.totalorder %s120, %s136
      %p138 = scmp.eq.s32.totalorder %s28, 0
      %p139 = por %p137, %p138
      %s140 = ssub.s32 %s29, %s41
      %s141 = ssub.s32 %s30, %s37
      %s142 = sor.u32 %s140, %s141
      %p143 = scmp.eq.s32.totalorder %s142, 0
      %s145 = sadd.s32 %s144, 1
      %s146 = scalar_select %p143, %s144, %s145
      %p149 = pneg %p143
      %p150 = scmp.eq.s32.totalorder %s22, 1
      %p151 = por %p149, %p150
      %p152 = scmp.ne.s32.totalorder %s144, %s147
      %p153 = scmp.eq.s32.totalorder %s22, 0
      %p154 = por %p152, %p153
      %p155 = scmp.ne.s32.totalorder %s144, %s147
      %p156 = scmp.eq.s32.totalorder %s27, 1
      %p157 = por %p155, %p156
      %p158 = scmp.ne.s32.totalorder %s147, %s148
      %p159 = scmp.eq.s32.totalorder %s27, 0
      %p160 = por %p158, %p159
      %p161 = scmp.ne.s32.totalorder %s147, %s148
      %p162 = scmp.eq.s32.totalorder %s28, 1
      %p163 = por %p161, %p162
      %p165 = scmp.ne.s32.totalorder %s148, %s164
      %p166 = scmp.eq.s32.totalorder %s28, 0
      %p167 = por %p165, %p166
      %s168 = ssub.s32 %s29, %s41
      %s169 = ssub.s32 %s30, %s37
      %s170 = sor.u32 %s168, %s169
      %p171 = scmp.eq.s32.totalorder %s170, 0
      %s173 = sadd.s32 %s172, 1
      %s174 = scalar_select %p171, %s172, %s173
      %p177 = pneg %p171
      %p178 = scmp.eq.s32.totalorder %s22, 1
      %p179 = por %p177, %p178
      %p180 = scmp.ne.s32.totalorder %s172, %s175
      %p181 = scmp.eq.s32.totalorder %s22, 0
      %p182 = por %p180, %p181
      %p183 = scmp.ne.s32.totalorder %s172, %s175
      %p184 = scmp.eq.s32.totalorder %s27, 1
      %p185 = por %p183, %p184
      %p186 = scmp.ne.s32.totalorder %s175, %s176
      %p187 = scmp.eq.s32.totalorder %s27, 0
      %p188 = por %p186, %p187
      %p189 = scmp.ne.s32.totalorder %s175, %s176
      %p190 = scmp.eq.s32.totalorder %s28, 1
      %p191 = por %p189, %p190
      %p193 = scmp.ne.s32.totalorder %s176, %s192
      %p194 = scmp.eq.s32.totalorder %s28, 0
      %p195 = por %p193, %p194
      %p196 = scmp.le.s32.totalorder 1, %s22
      %p197 = scmp.lt.s32.totalorder %s22, 3
      %p198 = pnand %p196, %p197
      %p199 = pneg %p198
      // Predicated region
      $region9: #{tpu_custom_call.1} parent=5 // pred_check
        _
      $region10: #{tpu_custom_call.1} parent=5 // pred_check_branch
        %201 = sbr.rel (%p198) target = $region12
      $region11: #{tpu_custom_call.1} parent=5 // pred_region
        %s202 = ssub.s32 %s22, 1
        // Predicated region
        $region13: #{tpu_custom_call.1} parent=11 // pred_check
          %p203 = pneg %p83
        $region14: #{tpu_custom_call.1} parent=11 // pred_check_branch
          %205 = sbr.rel (%p203) target = $region16
        $region15: #{tpu_custom_call.1} parent=11 // pred_region
          %207 = vsyncadd [#allocation6], 0
          %s208 = sshll.u32 %s1, 4
          %s209 = int_to_ptr.hbm [resolvable:$true] %s208
          %s210 = sshll.u32 [#allocation5], 4
          %s211 = int_to_ptr.vmem [resolvable:$true] %s210
          %216 = dma.hbm_to_vmem [thread:$0]  %s209, 256, %s211, [#allocation6], 64, 64, 4
        $region16: #{tpu_custom_call.1} parent=11 // pred_fallthru
          _
        // Predicated region
        $region17: #{tpu_custom_call.1} parent=11 // pred_check
          %p217 = pneg %p104
        $region18: #{tpu_custom_call.1} parent=11 // pred_check_branch
          %219 = sbr.rel (%p217) target = $region20
        $region19: #{tpu_custom_call.1} parent=11 // pred_region
          _
        $region20: #{tpu_custom_call.1} parent=11 // pred_fallthru
          _
      $region12: #{tpu_custom_call.1} parent=5 // pred_fallthru
        _
      %p220 = scmp.lt.s32.totalorder %s22, 2
      // Predicated region
      $region21: #{tpu_custom_call.1} parent=5 // pred_check
        %p221 = pneg %p220
      $region22: #{tpu_custom_call.1} parent=5 // pred_check_branch
        %223 = sbr.rel (%p221) target = $region24
      $region23: #{tpu_custom_call.1} parent=5 // pred_region
        // Predicated region
        $region25: #{tpu_custom_call.1} parent=23 // pred_check
          %p224 = pneg %p56
        $region26: #{tpu_custom_call.1} parent=23 // pred_check_branch
          %226 = sbr.rel (%p224) target = $region28
        $region27: #{tpu_custom_call.1} parent=23 // pred_region
          %s227 = sand.u32 %s46, 1
          %s228 = scalar_lea.sflag [#allocation3], %s227
          %s229 = sand.u32 %s46, 1
          %s230 = smul.addr %s229, 8
          %s231 = scalar_lea.vmem [#allocation2], %s230
          %233 = vsyncadd %s228, 0
          %s234 = sadd.s32 %s30, %s29
          %s235 = smul.addr %s234, 8
          %s236 = scalar_lea.hbm %s0, %s235
          %s238 = sshll.u32 %s236, 4
          %s239 = int_to_ptr.hbm [resolvable:$true] %s238
          %s240 = sshll.u32 %s231, 4
          %s241 = int_to_ptr.vmem [resolvable:$true] %s240
          %243 = dma.hbm_to_vmem [thread:$0]  %s239, 128, %s241, %s228
        $region28: #{tpu_custom_call.1} parent=23 // pred_fallthru
          _
      $region24: #{tpu_custom_call.1} parent=5 // pred_fallthru
        _
      %p244 = scmp.le.s32.totalorder 1, %s22
      %p245 = scmp.lt.s32.totalorder %s22, 3
      %p246 = pnand %p244, %p245
      %p247 = pneg %p246
      // Predicated region
      $region29: #{tpu_custom_call.1} parent=5 // pred_check
        _
      $region30: #{tpu_custom_call.1} parent=5 // pred_check_branch
        %249 = sbr.rel (%p246) target = $region32
      $region31: #{tpu_custom_call.1} parent=5 // pred_region
        %s250 = ssub.s32 %s22, 1
        %s251 = sand.u32 %s49, 1
        %s252 = scalar_lea.sflag [#allocation3], %s251
        %s253 = sand.u32 %s49, 1
        %s254 = smul.addr %s253, 8
        %s255 = scalar_lea.vmem [#allocation2], %s254
        // Predicated region
        $region33: #{tpu_custom_call.1} parent=31 // pred_check
          %p256 = pneg %p62
        $region34: #{tpu_custom_call.1} parent=31 // pred_check_branch
          %258 = sbr.rel (%p256) target = $region36
        $region35: #{tpu_custom_call.1} parent=31 // pred_region
          %260 = dma.done %s252, 128
        $region36: #{tpu_custom_call.1} parent=31 // pred_fallthru
          _
        // Predicated region
        $region37: #{tpu_custom_call.1} parent=31 // pred_check
          %p261 = pneg %p83
        $region38: #{tpu_custom_call.1} parent=31 // pred_check_branch
          %263 = sbr.rel (%p261) target = $region40
        $region39: #{tpu_custom_call.1} parent=31 // pred_region
          %265 = dma.done [#allocation6], 256
        $region40: #{tpu_custom_call.1} parent=31 // pred_fallthru
          _
        %s266 = sand.u32 %s49, 1
        %s267 = scalar_lea.sflag [#allocation3], %s266
        %s268 = sand.u32 %s49, 1
        %s269 = smul.addr %s268, 8
        %s270 = scalar_lea.vmem [#allocation2], %s269
        %p271 = pneg %p62
        %p272 = pneg %p59
        %p273 = pneg %p83
        %p274 = pneg %p80
        %p275 = pneg %p104
        %p276 = pneg %p101
        %p277 = pneg %p132
        %p278 = pneg %p129
        %s279 = sand.u32 %s119, 1
        %s280 = scalar_lea.sflag [#allocation4], %s279
        %s281 = sand.u32 %s119, 1
        %s282 = smul.addr %s281, 16
        %s283 = scalar_lea.vmem [#allocation7], %s282
        %p284 = pneg %p160
        %p285 = pneg %p157
        %s286 = sand.u32 %s27, 1
        %s287 = scalar_lea.sflag [#allocation9], %s286
        %s288 = sand.u32 %s147, 1
        %s289 = smul.addr %s288, 16
        %s290 = scalar_lea.vmem [#allocation8], %s289
        %p291 = pneg %p188
        %p292 = pneg %p185
        %s293 = sand.u32 %s27, 1
        %s294 = scalar_lea.sflag [#allocation9], %s293
        %s295 = sand.u32 %s175, 1
        %s296 = smul.addr %s295, 16
        %s297 = scalar_lea.vmem [#allocation10], %s296
        %v299 = vld [vmem:[%s255] sm:$0xff]
        %v300 = vpack.c.bf16 %v299, %v299
        %v301 = vld [vmem:[#allocation5] sm:$0xf]
        %v302 = vld [vmem:[#allocation5 + $0x4] sm:$0xf]
        %v303 = vld [vmem:[#allocation5 + $0x8] sm:$0xf]
        %v304 = vld [vmem:[#allocation5 + $0xc] sm:$0xf]
        %v305 = vld [vmem:[%s2] sm:$0x1]
        %v307 = vperm.slane %v305, 0
        %v313 = vunpack.c.l.b16 %v301
        %v314 = vunpack.c.l.b16 %v302
        %v315 = vunpack.c.l.b16 %v303
        %v316 = vunpack.c.l.b16 %v304
        %v317 = vpack.c.b16 %v314, %v313
        %v318 = vpack.c.b16 %v316, %v315
        %vm321 = vcmask 261120
        %v323 = vsel %vm321, %v300, 0
        %325 = vmatpush.bf16.msra.mxu0 0
        %326 = vmatpush.bf16.msra.mxu0 0
        %327 = vmatpush.bf16.msra.mxu0 0
        %328 = vmatpush.bf16.msra.mxu0 0
        %329 = vmatpush.bf16.msra.mxu0 0
        %330 = vmatpush.bf16.msra.mxu0 0
        %331 = vmatpush.bf16.msra.mxu0 %v318
        %332 = vmatpush.bf16.msra.mxu0 %v317
        %333 = vmatmul.bf16.gmra.mxu0 %v323
        %v334 = vpop.f32.mrf.mxu0
        %v335 = vadd.f32 %v307, %v334
        %v336 = vpop.f32.mrf.mxu0
        %337 = vdwg.mxu0
        %339 = vrot.lane.b32.xlu0 %v335, 96
        %v340 = vpop.permute.xlu0 %339
        %342 = vxpose.xlu0.b32.start [1/16] %v340, 128
        %343 = vxpose.xlu0.b32.cont [2/16] 0.0, 128
        %344 = vxpose.xlu0.b32.cont [3/16] 0.0, 128
        %345 = vxpose.xlu0.b32.cont [4/16] 0.0, 128
        %346 = vxpose.xlu0.b32.cont [5/16] 0.0, 128
        %347 = vxpose.xlu0.b32.cont [6/16] 0.0, 128
        %348 = vxpose.xlu0.b32.cont [7/16] 0.0, 128
        %349 = vxpose.xlu0.b32.cont [8/16] 0.0, 128
        %350 = vxpose.xlu0.b32.cont [9/16] 0.0, 128
        %351 = vxpose.xlu0.b32.cont [10/16] 0.0, 128
        %352 = vxpose.xlu0.b32.cont [11/16] 0.0, 128
        %353 = vxpose.xlu0.b32.cont [12/16] 0.0, 128
        %354 = vxpose.xlu0.b32.cont [13/16] 0.0, 128
        %355 = vxpose.xlu0.b32.cont [14/16] 0.0, 128
        %356 = vxpose.xlu0.b32.cont [15/16] 0.0, 128
        %357 = vxpose.xlu0.b32.end [16/16] 0.0, 128
        %v358 = vpop.trf.xlu0
        %v359 = vpop.trf.xlu0
        %v360 = vpop.trf.xlu0
        %v361 = vpop.trf.xlu0
        %v362 = vpop.trf.xlu0
        %v363 = vpop.trf.xlu0
        %v364 = vpop.trf.xlu0
        %v365 = vpop.trf.xlu0
        %v366 = vpop.trf.xlu0
        %v367 = vpop.trf.xlu0
        %v368 = vpop.trf.xlu0
        %v369 = vpop.trf.xlu0
        %v370 = vpop.trf.xlu0
        %v371 = vpop.trf.xlu0
        %v372 = vpop.trf.xlu0
        %v373 = vpop.trf.xlu0
        %v374 = vpack.c.bf16 %v335, %v335
        %vm375 = vcmask 60416
        %376 = vst.msk [vmem:[%s283] sm:$0xf] %vm375, %v374
        %v377 = vpack.c.bf16 %v358, %v358
        %378 = vst.msk [vmem:[%s290] sm:$0xf] %vm375, %v377
        %380 = vrot.lane.b32.xlu0 %v374, 64
        %v381 = vpop.permute.xlu0 %380
        %383 = vst.msk [vmem:[%s297] sm:$0xf] %vm375, %v381
        %384 = vrot.lane.b32.xlu0 %v374, 120
        %v385 = vpop.permute.xlu0 %384
        %s387 = scalar_lea.vmem %s283, 4 [#allocation7]
        %388 = vst.msk [vmem:[%s387] sm:$0xf] %vm375, %v385
        %v389 = vpack.c.bf16 %v359, %v359
        %s390 = scalar_lea.vmem %s290, 4 [#allocation8]
        %391 = vst.msk [vmem:[%s390] sm:$0xf] %vm375, %v389
        %392 = vrot.lane.b32.xlu0 %v374, 56
        %v393 = vpop.permute.xlu0 %392
        %s395 = scalar_lea.vmem %s297, 4 [#allocation10]
        %396 = vst.msk [vmem:[%s395] sm:$0xf] %vm375, %v393
        %397 = vrot.lane.b32.xlu0 %v374, 112
        %v398 = vpop.permute.xlu0 %397
        %s400 = scalar_lea.vmem %s283, 8 [#allocation7]
        %401 = vst.msk [vmem:[%s400] sm:$0xf] %vm375, %v398
        %v402 = vpack.c.bf16 %v360, %v360
        %s403 = scalar_lea.vmem %s290, 8 [#allocation8]
        %404 = vst.msk [vmem:[%s403] sm:$0xf] %vm375, %v402
        %405 = vrot.lane.b32.xlu0 %v374, 48
        %v406 = vpop.permute.xlu0 %405
        %s408 = scalar_lea.vmem %s297, 8 [#allocation10]
        %409 = vst.msk [vmem:[%s408] sm:$0xf] %vm375, %v406
        %410 = vrot.lane.b32.xlu0 %v374, 104
        %v411 = vpop.permute.xlu0 %410
        %s413 = scalar_lea.vmem %s283, 12 [#allocation7]
        %414 = vst.msk [vmem:[%s413] sm:$0xf] %vm375, %v411
        %v415 = vpack.c.bf16 %v361, %v361
        %s416 = scalar_lea.vmem %s290, 12 [#allocation8]
        %417 = vst.msk [vmem:[%s416] sm:$0xf] %vm375, %v415
        %418 = vrot.lane.b32.xlu0 %v374, 40
        %v419 = vpop.permute.xlu0 %418
        %s421 = scalar_lea.vmem %s297, 12 [#allocation10]
        %422 = vst.msk [vmem:[%s421] sm:$0xf] %vm375, %v419
        %s423 = sand.u32 %s119, 1
        %s424 = scalar_lea.sflag [#allocation4], %s423
        %s425 = sand.u32 %s119, 1
        %s426 = smul.addr %s425, 16
        %s427 = scalar_lea.vmem [#allocation7], %s426
        %s428 = sand.u32 %s27, 1
        %s429 = scalar_lea.sflag [#allocation9], %s428
        %s430 = sand.u32 %s147, 1
        %s431 = smul.addr %s430, 16
        %s432 = scalar_lea.vmem [#allocation8], %s431
        %s433 = sand.u32 %s27, 1
        %s434 = scalar_lea.sflag [#allocation9], %s433
        %s435 = sand.u32 %s175, 1
        %s436 = smul.addr %s435, 16
        %s437 = scalar_lea.vmem [#allocation10], %s436
        // Predicated region
        $region41: #{tpu_custom_call.1} parent=31 // pred_check
          %p438 = pneg %p129
        $region42: #{tpu_custom_call.1} parent=31 // pred_check_branch
          %440 = sbr.rel (%p438) target = $region44
        $region43: #{tpu_custom_call.1} parent=31 // pred_region
          %442 = vsyncadd %s424, 0
          %s443 = smul.addr %s31, 4
          %s444 = sadd.s32 %s32, %s443
          %s445 = smul.addr %s444, 4
          %s446 = scalar_lea.hbm %s3, %s445
          %s447 = sshll.u32 %s427, 4
          %s448 = int_to_ptr.vmem [resolvable:$true] %s447
          %s449 = sshll.u32 %s446, 4
          %s450 = int_to_ptr.hbm [resolvable:$true] %s449
          %455 = dma.vmem_to_hbm [thread:$0]  %s448, 256, %s450, %s424, 64, 64, 4
        $region44: #{tpu_custom_call.1} parent=31 // pred_fallthru
          _
        // Predicated region
        $region45: #{tpu_custom_call.1} parent=31 // pred_check
          %p456 = pneg %p157
        $region46: #{tpu_custom_call.1} parent=31 // pred_check_branch
          %458 = sbr.rel (%p456) target = $region48
        $region47: #{tpu_custom_call.1} parent=31 // pred_region
          %460 = vsyncadd %s429, 0
          %s461 = smul.addr %s31, 4
          %s462 = sadd.s32 %s32, %s461
          %s463 = smul.addr %s462, 4
          %s464 = scalar_lea.hbm %s4, %s463
          %s465 = sshll.u32 %s432, 4
          %s466 = int_to_ptr.vmem [resolvable:$true] %s465
          %s467 = sshll.u32 %s464, 4
          %s468 = int_to_ptr.hbm [resolvable:$true] %s467
          %473 = dma.vmem_to_hbm [thread:$0]  %s466, 256, %s468, %s429, 64, 64, 4
        $region48: #{tpu_custom_call.1} parent=31 // pred_fallthru
          _
        // Predicated region
        $region49: #{tpu_custom_call.1} parent=31 // pred_check
          %p474 = pneg %p185
        $region50: #{tpu_custom_call.1} parent=31 // pred_check_branch
          %476 = sbr.rel (%p474) target = $region52
        $region51: #{tpu_custom_call.1} parent=31 // pred_region
          %478 = vsyncadd %s434, 0
          %s479 = smul.addr %s31, 4
          %s480 = sadd.s32 %s32, %s479
          %s481 = smul.addr %s480, 4
          %s482 = scalar_lea.hbm %s5, %s481
          %s483 = sshll.u32 %s437, 4
          %s484 = int_to_ptr.vmem [resolvable:$true] %s483
          %s485 = sshll.u32 %s482, 4
          %s486 = int_to_ptr.hbm [resolvable:$true] %s485
          %491 = dma.vmem_to_hbm [thread:$0]  %s484, 256, %s486, %s434, 64, 64, 4
        $region52: #{tpu_custom_call.1} parent=31 // pred_fallthru
          _
      $region32: #{tpu_custom_call.1} parent=5 // pred_fallthru
        _
      %p492 = scmp.le.s32.totalorder 2, %s22
      // Predicated region
      $region53: #{tpu_custom_call.1} parent=5 // pred_check
        %p493 = pneg %p492
      $region54: #{tpu_custom_call.1} parent=5 // pred_check_branch
        %495 = sbr.rel (%p493) target = $region56
      $region55: #{tpu_custom_call.1} parent=5 // pred_region
        %s496 = ssub.s32 %s22, 2
        // Predicated region
        $region57: #{tpu_custom_call.1} parent=55 // pred_check
          %p497 = pneg %p135
        $region58: #{tpu_custom_call.1} parent=55 // pred_check_branch
          %499 = sbr.rel (%p497) target = $region60
        $region59: #{tpu_custom_call.1} parent=55 // pred_region
          %s500 = sand.u32 %s120, 1
          %s501 = scalar_lea.sflag [#allocation4], %s500
          %s502 = sand.u32 %s120, 1
          %s503 = smul.addr %s502, 16
          %s504 = scalar_lea.vmem [#allocation7], %s503
          %506 = dma.done %s501, 256
        $region60: #{tpu_custom_call.1} parent=55 // pred_fallthru
          _
        // Predicated region
        $region61: #{tpu_custom_call.1} parent=55 // pred_check
          %p507 = pneg %p163
        $region62: #{tpu_custom_call.1} parent=55 // pred_check_branch
          %509 = sbr.rel (%p507) target = $region64
        $region63: #{tpu_custom_call.1} parent=55 // pred_region
          %s510 = sand.u32 %s28, 1
          %s511 = scalar_lea.sflag [#allocation9], %s510
          %s512 = sand.u32 %s148, 1
          %s513 = smul.addr %s512, 16
          %s514 = scalar_lea.vmem [#allocation8], %s513
          %516 = dma.done %s511, 256
        $region64: #{tpu_custom_call.1} parent=55 // pred_fallthru
          _
        // Predicated region
        $region65: #{tpu_custom_call.1} parent=55 // pred_check
          %p517 = pneg %p191
        $region66: #{tpu_custom_call.1} parent=55 // pred_check_branch
          %519 = sbr.rel (%p517) target = $region68
        $region67: #{tpu_custom_call.1} parent=55 // pred_region
          %s520 = sand.u32 %s28, 1
          %s521 = scalar_lea.sflag [#allocation9], %s520
          %s522 = sand.u32 %s176, 1
          %s523 = smul.addr %s522, 16
          %s524 = scalar_lea.vmem [#allocation10], %s523
          %526 = dma.done %s521, 256
        $region68: #{tpu_custom_call.1} parent=55 // pred_fallthru
          _
      $region56: #{tpu_custom_call.1} parent=5 // pred_fallthru
        _
    $region6: #{tpu_custom_call.1} parent=1 // loop_footer
      %s26 = sadd.s32 1, %s22
    $region7: #{tpu_custom_call.1} parent=1 // loop_footer_branch
      %21 = sbr.rel target = $region3
    $region8: #{tpu_custom_call.1} parent=1 // loop_exit
      _
    %527 = vsyncpa [#allocation3], 1
    %s528 = scalar_lea.sflag [#allocation3], 1
    %529 = vsyncpa %s528, 1
    %530 = vsyncpa [#allocation6], 1
    %531 = vsyncpa [#allocation4], 1
    %s532 = scalar_lea.sflag [#allocation4], 1
    %533 = vsyncpa %s532, 1
    %534 = vsyncpa [#allocation9], 1
    %s535 = scalar_lea.sflag [#allocation9], 1
    %536 = vsyncpa %s535, 1

</llo_original>
